<compile_context>
chip_gen: v7x
topology: tpu7x:2x2x1
jax: 0.10.0
libtpu: 0.0.40
codegen_flags: <defaults>
</compile_context>

<pallas_src>
import functools

import jax
import jax.numpy as jnp
from jax import lax
from jax.experimental import pallas as pl
from jax.experimental.pallas import tpu as pltpu


def _linear_kernel(x_ref, w_ref, b_ref, o_ref):
    # x_ref: (TB, F)  activations
    # w_ref: (A, F)   weight in PyTorch (out_features, in_features) layout
    # b_ref: (1, A)   bias
    # o_ref: (TB, A)  logits
    acc = lax.dot_general(
        x_ref[...], w_ref[...],
        dimension_numbers=(((1,), (1,)), ((), ())),   # contract on F of both
        preferred_element_type=jnp.float32,
    )
    o_ref[...] = (acc + b_ref[...]).astype(o_ref.dtype)


@functools.partial(jax.jit, static_argnames=("block_batch",))
def policy_network_forward(x, weight, bias, *, block_batch=8192):
    """logits = x @ weight.T + bias   (nn.Linear semantics).

    x:      (B, F)  float32
    weight: (A, F)  float32   -- PyTorch nn.Linear weight layout (not transposed)
    bias:   (A,)    float32
    returns (B, A)  float32
    """
    B, F = x.shape
    A, Fw = weight.shape
    assert Fw == F, "weight in_features must match x features"

    # Batch tiling: small B -> one full-extent tile (no (8,128) constraint,
    # no padding). Large B -> tile of `block_batch` rows (forced multiple of 8)
    # with batch padded up to a whole number of tiles.
    block_batch = max(8, (block_batch // 8) * 8)
    if B <= block_batch:
        TB, Bp = B, B
    else:
        TB = block_batch
        Bp = pl.cdiv(B, TB) * TB

    x_p = x if Bp == B else jnp.zeros((Bp, F), x.dtype).at[:B].set(x)
    b2 = bias.reshape(1, A)

    grid = (Bp // TB,)
    vmem = pltpu.MemorySpace.VMEM

    cost = pl.CostEstimate(
        flops=2 * B * F * A,
        transcendentals=0,
        bytes_accessed=4 * (B * F + A * F + A + B * A),
    )

    out_p = pl.pallas_call(
        _linear_kernel,
        out_shape=jax.ShapeDtypeStruct((Bp, A), x.dtype),
        grid=grid,
        in_specs=[
            pl.BlockSpec((TB, F), lambda i: (i, 0), memory_space=vmem),  # x tile
            pl.BlockSpec((A, F), lambda i: (0, 0), memory_space=vmem),   # weight (resident)
            pl.BlockSpec((1, A), lambda i: (0, 0), memory_space=vmem),   # bias   (resident)
        ],
        out_specs=pl.BlockSpec((TB, A), lambda i: (i, 0), memory_space=vmem),
        compiler_params=pltpu.CompilerParams(
            dimension_semantics=("parallel",),     # batch axis: megacore-shardable
        ),
        cost_estimate=cost,
    )(x_p, weight, b2)

    return out_p if Bp == B else out_p[:B]


if __name__ == "__main__":
    # Small shapes consistent with the module: input_shape=(16,), num_actions=4
    batch = 8
    in_features = 16
    num_actions = 4

    key = jax.random.PRNGKey(0)
    kx, kw, kb = jax.random.split(key, 3)

    x = jax.random.normal(kx, (batch, in_features), dtype=jnp.float32)
    # Deterministic parameter init (synthetic; mimics nn.Linear's uniform bound)
    bound = 1.0 / (in_features ** 0.5)
    weight = jax.random.uniform(
        kw, (num_actions, in_features), minval=-bound, maxval=bound,
        dtype=jnp.float32)
    bias = jax.random.uniform(
        kb, (num_actions,), minval=-bound, maxval=bound, dtype=jnp.float32)

    # Nominal small-batch path (single full-extent tile, no padding anywhere).
    logits = policy_network_forward(x, weight, bias)
    jax.block_until_ready(logits)
    ref = x @ weight.T + bias
    assert logits.shape == (batch, num_actions)
    assert jnp.allclose(logits, ref, atol=1e-5), "mismatch vs reference (small B)"

    # Exercise the tiled / padded-batch path (grid > 1, B not multiple of tile).
    x_big = jax.random.normal(jax.random.PRNGKey(1), (20, in_features),
                              dtype=jnp.float32)
    logits_big = policy_network_forward(x_big, weight, bias, block_batch=16)
    jax.block_until_ready(logits_big)
    ref_big = x_big @ weight.T + bias
    assert logits_big.shape == (20, num_actions)
    assert jnp.allclose(logits_big, ref_big, atol=1e-5), "mismatch vs reference (tiled B)"

    print("KERNEL_OK")
</pallas_src>

<mosaic_0001>
module attributes {stable_mosaic.version = 11 : i64} {
  func.func @_linear_kernel(%arg0: i32, %arg1: memref<8x16xf32, #tpu.memory_space<vmem>>, %arg2: memref<4x16xf32, #tpu.memory_space<vmem>>, %arg3: memref<1x4xf32, #tpu.memory_space<vmem>>, %arg4: memref<8x4xf32, #tpu.memory_space<vmem>>) attributes {dimension_semantics = [#tpu.dimension_semantics<parallel>], iteration_bounds = array<i64: 1>, scalar_prefetch = 0 : i64, scratch_operands = 0 : i64, tpu.core_type = #tpu.core_type<tc>, window_params = [{transform_indices = @transform_0, window_bounds = array<i64: 8, 16>}, {pipeline_mode = #tpu.pipeline_mode<synchronous>, transform_indices = @transform_1, window_bounds = array<i64: 4, 16>}, {pipeline_mode = #tpu.pipeline_mode<synchronous>, transform_indices = @transform_2, window_bounds = array<i64: 1, 4>}, {transform_indices = @transform_3, window_bounds = array<i64: 8, 4>}]} {
    %c0 = arith.constant 0 : index
    %c0_0 = arith.constant 0 : index
    %0 = vector.load %arg1[%c0, %c0_0] : memref<8x16xf32, #tpu.memory_space<vmem>>, vector<8x16xf32>
    %c0_1 = arith.constant 0 : index
    %c0_2 = arith.constant 0 : index
    %1 = vector.load %arg2[%c0_1, %c0_2] : memref<4x16xf32, #tpu.memory_space<vmem>>, vector<4x16xf32>
    %cst = arith.constant dense<0.000000e+00> : vector<8x4xf32>
    %2 = tpu.matmul %0, %1, %cst {dimension_numbers = #tpu.dot_dimension_numbers<[1], [1], [0], [0], [0, 0, 1, 0], [], []>} : vector<8x16xf32>, vector<4x16xf32>, vector<8x4xf32> -> vector<8x4xf32>
    %c0_3 = arith.constant 0 : index
    %c0_4 = arith.constant 0 : index
    %3 = vector.load %arg3[%c0_3, %c0_4] : memref<1x4xf32, #tpu.memory_space<vmem>>, vector<1x4xf32>
    %4 = vector.broadcast %3 : vector<1x4xf32> to vector<8x4xf32>
    %5 = arith.addf %2, %4 : vector<8x4xf32>
    %c0_5 = arith.constant 0 : index
    %c0_6 = arith.constant 0 : index
    %6 = vector.load %arg4[%c0_5, %c0_6] : memref<8x4xf32, #tpu.memory_space<vmem>>, vector<8x4xf32>
    tpu.vector_store %arg4[%c0_5, %c0_6], %5 {strides = array<i32>} : memref<8x4xf32, #tpu.memory_space<vmem>>, vector<8x4xf32>,
    return
  }
  func.func @transform_0(%arg0: i32) -> (i32, i32) {
    %c0_i32 = arith.constant 0 : i32
    %c0_i32_0 = arith.constant 0 : i32
    return %arg0, %c0_i32 : i32, i32
  }
  func.func @transform_1(%arg0: i32) -> (i32, i32) {
    %c0_i32 = arith.constant 0 : i32
    %c0_i32_0 = arith.constant 0 : i32
    %c0_i32_1 = arith.constant 0 : i32
    return %c0_i32, %c0_i32_0 : i32, i32
  }
  func.func @transform_2(%arg0: i32) -> (i32, i32) {
    %c0_i32 = arith.constant 0 : i32
    %c0_i32_0 = arith.constant 0 : i32
    %c0_i32_1 = arith.constant 0 : i32
    return %c0_i32, %c0_i32_0 : i32, i32
  }
  func.func @transform_3(%arg0: i32) -> (i32, i32) {
    %c0_i32 = arith.constant 0 : i32
    %c0_i32_0 = arith.constant 0 : i32
    return %arg0, %c0_i32 : i32, i32
  }
}

</mosaic_0001>

<llo_original>
// kernel: policy_network_forward.1
$region0: #{policy_network_forward.1}
  #allocation0 [shape = 'u32[]', space=smem, size = 0x4, offset = 0x4, fixed_abs, tag = 'smem constant byte address 0x4 - core index']
  #allocation1 [shape = 'u32[144,128]{1,0:T(1,128)}', space=vmem, size = 0x12000, scoped, tag = 'internal scratch']
  %s0 = inlined_call_operand.hbm [shape: f32[8,16], index: 0, kind: input, shape index: {}]
  %s1 = inlined_call_operand.vmem [shape: f32[4,16], index: 1, kind: input, shape index: {}]
  %s2 = inlined_call_operand.vmem [shape: f32[1,4], index: 2, kind: input, shape index: {}]
  %s3 = inlined_call_operand.vmem [shape: f32[8,4], index: 3, kind: output, shape index: {}]
  %s4 = sld [smem:[#allocation0]]
  $region26: #{policy_network_forward.1} parent=0
    _
  %s6 = ssub.s32 1, %s4
  %s7 = scalar_select 0, %s6, %s4
  $region1: #{policy_network_forward.1} parent=0
    #allocation2 [shape = 'u8[4096]{0}', space=vmem, size = 0x1000, scoped, tag = 'input window, operand 0, single buffered']
    #allocation3 [shape = 's32[1]{0}', space=sflag, size = 0x4, scoped, tag = 'scoped memory for policy_network_forward.1']
    %8 = vsyncpa [#allocation3], 0
    // Predicated region
    $region2: #{policy_network_forward.1} parent=1 // pred_check
      _
    $region3: #{policy_network_forward.1} parent=1 // pred_check_branch
      %10 = sbr.rel (0) target = $region5
    $region4: #{policy_network_forward.1} parent=1 // pred_region
      %s12 = ssub.s32 128, 128
      %13 = vsyncadd [#allocation3], %s12
      %s15 = sshll.u32 [#allocation2], 4
      %s16 = int_to_ptr.vmem [resolvable:$true] %s15
      %18 = dma.hbm_to_vmem [thread:$0]  %s0, 128, %s16, [#allocation3]
    $region5: #{policy_network_forward.1} parent=1 // pred_fallthru
      _
    // Predicated region
    $region6: #{policy_network_forward.1} parent=1 // pred_check
      _
    $region7: #{policy_network_forward.1} parent=1 // pred_check_branch
      %20 = sbr.rel (0) target = $region9
    $region8: #{policy_network_forward.1} parent=1 // pred_region
      _
    $region9: #{policy_network_forward.1} parent=1 // pred_fallthru
      _
    // Predicated region
    $region10: #{policy_network_forward.1} parent=1 // pred_check
      _
    $region11: #{policy_network_forward.1} parent=1 // pred_check_branch
      %22 = sbr.rel (0) target = $region13
    $region12: #{policy_network_forward.1} parent=1 // pred_region
      _
    $region13: #{policy_network_forward.1} parent=1 // pred_fallthru
      _
    // Predicated region
    $region14: #{policy_network_forward.1} parent=1 // pred_check
      _
    $region15: #{policy_network_forward.1} parent=1 // pred_check_branch
      %24 = sbr.rel (0) target = $region17
    $region16: #{policy_network_forward.1} parent=1 // pred_region
      %25 = dma.done [#allocation3], 128
    $region17: #{policy_network_forward.1} parent=1 // pred_fallthru
      _
    %v26 = vld [vmem:[#allocation2] sm:$0xff]
    %v27 = vld [vmem:[%s1] sm:$0xf]
    %v28 = vld [vmem:[%s2] sm:$0x1]
    %v30 = vlaneseq
    %v31 = vshrl.u32 %v30, 7
    %v32 = vsub.s32 0, %v31
    %v33 = vrot.slane %v28, %v32
    %vm35 = vcmask 130048
    %v37 = vsel %vm35, %v26, 0
    %v40 = vsel %vm35, %v27, 0
    %42 = vmatprep.subr.mxu0 0.0
    %43 = vmatpush1.xpose.msra.mxu0 %v40
    %44 = vmatprep.subr.mxu0 0.0
    %45 = vmatpush1.xpose.msra.mxu0 0.0
    %46 = vmatprep.subr.mxu0 0.0
    %47 = vmatpush1.xpose.msra.mxu0 0.0
    %48 = vmatprep.subr.mxu0 0.0
    %49 = vmatpush1.xpose.msra.mxu0 0.0
    %50 = vmatprep.subr.mxu0 0.0
    %51 = vmatpush1.xpose.msra.mxu0 0.0
    %52 = vmatprep.subr.mxu0 0.0
    %53 = vmatpush1.xpose.msra.mxu0 0.0
    %54 = vmatprep.subr.mxu0 0.0
    %55 = vmatpush1.xpose.msra.mxu0 0.0
    %56 = vmatprep.subr.mxu0 0.0
    %57 = vmatpush1.xpose.msra.mxu0 0.0
    %58 = vmatprep.subr.mxu0 0.0
    %59 = vmatpush1.xpose.msra.mxu0 0.0
    %60 = vmatprep.subr.mxu0 0.0
    %61 = vmatpush1.xpose.msra.mxu0 0.0
    %62 = vmatprep.subr.mxu0 0.0
    %63 = vmatpush1.xpose.msra.mxu0 0.0
    %64 = vmatprep.subr.mxu0 0.0
    %65 = vmatpush1.xpose.msra.mxu0 0.0
    %66 = vmatprep.subr.mxu0 0.0
    %67 = vmatpush1.xpose.msra.mxu0 0.0
    %68 = vmatprep.subr.mxu0 0.0
    %69 = vmatpush1.xpose.msra.mxu0 0.0
    %70 = vmatprep.subr.mxu0 0.0
    %71 = vmatpush1.xpose.msra.mxu0 0.0
    %72 = vmatprep.subr.mxu0 0.0
    %73 = vmatpush1.xpose.msra.mxu0 0.0
    %74 = vmatprep.subr.mxu0 0.0
    %75 = vmatpush1.xpose.msra.mxu0 0.0
    %76 = vmatprep.subr.mxu0 0.0
    %77 = vmatpush1.xpose.msra.mxu0 0.0
    %78 = vmatprep.subr.mxu0 0.0
    %79 = vmatpush1.xpose.msra.mxu0 0.0
    %80 = vmatprep.subr.mxu0 0.0
    %81 = vmatpush1.xpose.msra.mxu0 0.0
    %82 = vmatprep.subr.mxu0 0.0
    %83 = vmatpush1.xpose.msra.mxu0 0.0
    %84 = vmatprep.subr.mxu0 0.0
    %85 = vmatpush1.xpose.msra.mxu0 0.0
    %86 = vmatprep.subr.mxu0 0.0
    %87 = vmatpush1.xpose.msra.mxu0 0.0
    %88 = vmatprep.subr.mxu0 0.0
    %89 = vmatpush1.xpose.msra.mxu0 0.0
    %90 = vmatprep.subr.mxu0 0.0
    %91 = vmatpush1.xpose.msra.mxu0 0.0
    %92 = vmatprep.subr.mxu0 0.0
    %93 = vmatpush1.xpose.msra.mxu0 0.0
    %94 = vmatprep.subr.mxu0 0.0
    %95 = vmatpush1.xpose.msra.mxu0 0.0
    %96 = vmatprep.subr.mxu0 0.0
    %97 = vmatpush1.xpose.msra.mxu0 0.0
    %98 = vmatprep.subr.mxu0 0.0
    %99 = vmatpush1.xpose.msra.mxu0 0.0
    %100 = vmatprep.subr.mxu0 0.0
    %101 = vmatpush1.xpose.msra.mxu0 0.0
    %102 = vmatprep.subr.mxu0 0.0
    %103 = vmatpush1.xpose.msra.mxu0 0.0
    %104 = vmatprep.subr.mxu0 0.0
    %105 = vmatpush1.xpose.msra.mxu0 0.0
    %106 = vmatprep.mubr.f32.mxu0 0.0
    %107 = vmatmul.mubr.f32.gmra.mrb[0].mxu0 %v37
    %v108 = vpop.f32.mrb[0].mxu0
    %v109 = vadd.f32 %v33, %v108
    %v110 = vpop.f32.mrb[0].mxu0
    %111 = vdwg.mxu0
    %vm112 = vcmask 31744
    %113 = vst.msk [vmem:[%s3] sm:$0xff] %vm112, %v109
    // Predicated region
    $region18: #{policy_network_forward.1} parent=1 // pred_check
      _
    $region19: #{policy_network_forward.1} parent=1 // pred_check_branch
      %115 = sbr.rel (0) target = $region21
    $region20: #{policy_network_forward.1} parent=1 // pred_region
      _
    $region21: #{policy_network_forward.1} parent=1 // pred_fallthru
      _
    // Predicated region
    $region22: #{policy_network_forward.1} parent=1 // pred_check
      _
    $region23: #{policy_network_forward.1} parent=1 // pred_check_branch
      %117 = sbr.rel (0) target = $region25
    $region24: #{policy_network_forward.1} parent=1 // pred_region
      _
    $region25: #{policy_network_forward.1} parent=1 // pred_fallthru
      _
    %118 = vsyncpa [#allocation3], 1

</llo_original>
